<compile_context>
chip_gen: v6e
topology: v6e:2x2x1
jax: 0.10.0
libtpu: 0.0.40
codegen_flags: <defaults>
</compile_context>

<pallas_src>
import functools

import jax
import jax.numpy as jnp
from jax.experimental import pallas as pl
from jax.experimental.pallas import tpu as pltpu

LANE = 128


def _round_up(x, m):
    return (x + m - 1) // m * m


def head_kernel(hp, causal, x_ref, vq_ref, vk_ref, w_ref, b_ref, o_ref):
    bb, t, e = x_ref.shape

    # Fused Q|K|V projection on the flattened (bb*t, E) slab: one MXU push
    # with bb*t rows and 3*HP output lanes (hs**-0.5 already folded into Q).
    x2d = x_ref[...].reshape(bb * t, e).astype(jnp.bfloat16)
    qkv = jnp.dot(x2d, w_ref[...], preferred_element_type=jnp.float32)
    qkv = (qkv + b_ref[...]).reshape(bb, t, 3 * hp)       # f32

    q = qkv[:, :, :hp]            # lane-aligned 128-wide slices (no sub-lane cuts)
    k = qkv[:, :, hp:2 * hp]
    v = qkv[:, :, 2 * hp:]

    # wei = (Q * hs^-0.5) @ K^T, contracting the (zero-padded) head dim.
    wei = jnp.einsum("bqd,bkd->bqk",
                     q.astype(jnp.bfloat16), k.astype(jnp.bfloat16),
                     preferred_element_type=jnp.float32)

    # Rebuild the padding (+ optional causal) mask in-kernel from the two
    # O(T) valid vectors — no (T, T) mask ever touches HBM.
    ok = (vq_ref[...] > 0.0) & (vk_ref[...] > 0.0)                 # (bb, t, t)
    if causal:
        row = jax.lax.broadcasted_iota(jnp.int32, (bb, t, t), 1)
        col = jax.lax.broadcasted_iota(jnp.int32, (bb, t, t), 2)
        ok = ok & (row >= col)
    # -1e30 (not -inf) keeps fully-padded rows finite (uniform) instead of NaN.
    wei = jnp.where(ok, wei, -1e30)

    # Numerically-stable softmax; reciprocal goes to the EUP slot.
    wei = wei - jnp.max(wei, axis=-1, keepdims=True)
    p = jnp.exp(wei)
    p = p * pl.reciprocal(jnp.sum(p, axis=-1, keepdims=True), approx=True)

    out = jnp.einsum("bqk,bkd->bqd",
                     p.astype(jnp.bfloat16), v.astype(jnp.bfloat16),
                     preferred_element_type=jnp.float32)

    # Lane-dense bf16 packed stores: out -> [0, HP), K|V -> [HP, 3*HP).
    o_ref[:, :, :hp] = out.astype(o_ref.dtype)
    o_ref[:, :, hp:] = qkv[:, :, hp:].astype(o_ref.dtype)


def pack_qkv_params(params, n_embd, head_size):
    """Concatenate + zero-pad Q/K/V weights to (E, 3*HP); fold scale into Q."""
    hp = _round_up(head_size, LANE)
    scale = head_size ** -0.5
    w = jnp.zeros((n_embd, 3 * hp), jnp.float32)
    w = w.at[:, :head_size].set(params["wq"] * scale)
    w = w.at[:, hp:hp + head_size].set(params["wk"])
    w = w.at[:, 2 * hp:2 * hp + head_size].set(params["wv"])
    b = jnp.zeros((1, 3 * hp), jnp.float32)
    b = b.at[0, :head_size].set(params["bq"] * scale)
    b = b.at[0, hp:hp + head_size].set(params["bk"])
    b = b.at[0, 2 * hp:2 * hp + head_size].set(params["bv"])
    return w.astype(jnp.bfloat16), b, hp


def head_forward(x, params, *, head_size, causal=True, pad_token_id=0.0,
                 batch_block=None):
    B, T, E = x.shape
    if batch_block is None:
        # Keep a >=2-wide "parallel" grid so both v7x TensorCores get work;
        # on single-TC chips (v5e/v6e) pass batch_block=B for one big step.
        batch_block = max(1, B // 2)
    assert B % batch_block == 0, "batch_block must divide B"
    w_qkv, b_qkv, hp = pack_qkv_params(params, E, head_size)

    # Padding flags: only O(B*T) HBM traffic (vs the old O(B*T^2) f32 bias).
    # Two layouts (query-side column / key-side row) avoid an in-kernel
    # cross-lane transpose.
    valid = (x[:, :, 0] != pad_token_id).astype(jnp.float32)       # (B, T)
    valid_q = valid[:, :, None]                                    # (B, T, 1)
    valid_k = valid[:, None, :]                                    # (B, 1, T)

    kernel = functools.partial(head_kernel, hp, causal)
    # NOTE: w_qkv / b_qkv have constant index maps; pipeline_mode=pl.Buffered(1)
    # would drop their redundant second VMEM buffer — omitted here to keep the
    # lowering maximally portable (benefit is marginal at these sizes).
    packed = pl.pallas_call(
        kernel,
        out_shape=jax.ShapeDtypeStruct((B, T, 3 * hp), jnp.bfloat16),
        grid=(B // batch_block,),
        in_specs=[
            pl.BlockSpec((batch_block, T, E), lambda g: (g, 0, 0)),    # x
            pl.BlockSpec((batch_block, T, 1), lambda g: (g, 0, 0)),    # valid (q)
            pl.BlockSpec((batch_block, 1, T), lambda g: (g, 0, 0)),    # valid (k)
            pl.BlockSpec((E, 3 * hp), lambda g: (0, 0)),               # fused W_qkv
            pl.BlockSpec((1, 3 * hp), lambda g: (0, 0)),               # fused b_qkv
        ],
        out_specs=pl.BlockSpec((batch_block, T, 3 * hp), lambda g: (g, 0, 0)),
        compiler_params=pltpu.CompilerParams(
            dimension_semantics=("parallel",)),
    )(x, valid_q, valid_k, w_qkv, b_qkv)

    out = packed[:, :, :head_size]
    K = packed[:, :, hp:hp + head_size]
    V = packed[:, :, 2 * hp:2 * hp + head_size]
    return out, K, V


def make_head_params(key, n_embd, head_size):
    ks = jax.random.split(key, 6)
    rnd = lambda k, shape: (0.1 * jax.random.normal(k, shape)).astype(jnp.float32)
    return dict(
        wq=rnd(ks[0], (n_embd, head_size)), bq=rnd(ks[1], (head_size,)),
        wk=rnd(ks[2], (n_embd, head_size)), bk=rnd(ks[3], (head_size,)),
        wv=rnd(ks[4], (n_embd, head_size)), bv=rnd(ks[5], (head_size,)),
    )


def head_reference(x, params, *, head_size, causal=True, pad_token_id=0.0):
    """Pure-JAX f32 reference mirroring the PyTorch Head (self-attention)."""
    B, T, E = x.shape
    Q = x @ params["wq"] + params["bq"]
    K = x @ params["wk"] + params["bk"]
    V = x @ params["wv"] + params["bv"]
    wei = jnp.einsum("bqd,bkd->bqk", Q, K) * head_size ** -0.5
    valid = x[:, :, 0] != pad_token_id
    mask = valid[:, :, None] & valid[:, None, :]
    if causal:
        tril = jnp.arange(T)[:, None] >= jnp.arange(T)[None, :]
        mask = mask & tril[None]
    wei = jnp.where(mask, wei, -jnp.inf)
    wei = jax.nn.softmax(wei, axis=-1)
    out = jnp.einsum("bqk,bkd->bqd", wei, V)
    return out, K, V


if __name__ == "__main__":
    B, T, E, HS = 2, 8, 32, 16   # batch, block_size (seq), n_embd, head_size
    key = jax.random.PRNGKey(0)
    kx, kp = jax.random.split(key)
    x = jax.random.normal(kx, (B, T, E), dtype=jnp.float32)
    params = make_head_params(kp, E, HS)

    out, K, V = head_forward(x, params, head_size=HS, causal=True)
    jax.block_until_ready((out, K, V))

    ref_out, ref_K, ref_V = head_reference(x, params, head_size=HS, causal=True)
    # Tolerance accounts for bf16 matmul operands and bf16 output writeback.
    out32, K32, V32 = (out.astype(jnp.float32), K.astype(jnp.float32),
                       V.astype(jnp.float32))
    assert jnp.allclose(out32, ref_out, atol=5e-2, rtol=5e-2), \
        float(jnp.max(jnp.abs(out32 - ref_out)))
    assert jnp.allclose(K32, ref_K, atol=5e-2, rtol=5e-2), \
        float(jnp.max(jnp.abs(K32 - ref_K)))
    assert jnp.allclose(V32, ref_V, atol=5e-2, rtol=5e-2), \
        float(jnp.max(jnp.abs(V32 - ref_V)))

    print("KERNEL_OK")
</pallas_src>

<mosaic_0001>
module attributes {stable_mosaic.version = 11 : i64} {
  func.func @head_kernel(%arg0: i32, %arg1: memref<1x8x32xf32, #tpu.memory_space<vmem>>, %arg2: memref<1x8x1xf32, #tpu.memory_space<vmem>>, %arg3: memref<1x1x8xf32, #tpu.memory_space<vmem>>, %arg4: memref<32x384xbf16, #tpu.memory_space<vmem>>, %arg5: memref<1x384xf32, #tpu.memory_space<vmem>>, %arg6: memref<1x8x384xbf16, #tpu.memory_space<vmem>>) attributes {dimension_semantics = [#tpu.dimension_semantics<parallel>], iteration_bounds = array<i64: 2>, scalar_prefetch = 0 : i64, scratch_operands = 0 : i64, tpu.core_type = #tpu.core_type<tc>, window_params = [{transform_indices = @transform_0, window_bounds = array<i64: 1, 8, 32>}, {transform_indices = @transform_1, window_bounds = array<i64: 1, 8, 1>}, {transform_indices = @transform_2, window_bounds = array<i64: 1, 1, 8>}, {pipeline_mode = #tpu.pipeline_mode<synchronous>, transform_indices = @transform_3, window_bounds = array<i64: 32, 384>}, {pipeline_mode = #tpu.pipeline_mode<synchronous>, transform_indices = @transform_4, window_bounds = array<i64: 1, 384>}, {transform_indices = @transform_5, window_bounds = array<i64: 1, 8, 384>}]} {
    %c0 = arith.constant 0 : index
    %c0_0 = arith.constant 0 : index
    %c0_1 = arith.constant 0 : index
    %0 = vector.load %arg1[%c0, %c0_0, %c0_1] : memref<1x8x32xf32, #tpu.memory_space<vmem>>, vector<1x8x32xf32>
    %1 = vector.shape_cast %0 : vector<1x8x32xf32> to vector<8x32xf32>
    %2 = arith.truncf %1 : vector<8x32xf32> to vector<8x32xbf16>
    %c0_2 = arith.constant 0 : index
    %c0_3 = arith.constant 0 : index
    %3 = vector.load %arg4[%c0_2, %c0_3] : memref<32x384xbf16, #tpu.memory_space<vmem>>, vector<32x384xbf16>
    %cst = arith.constant dense<0.000000e+00> : vector<8x384xf32>
    %4 = tpu.matmul %2, %3, %cst {dimension_numbers = #tpu.dot_dimension_numbers<[1], [0], [0], [1], [0, 0, 1, 1], [], []>} : vector<8x32xbf16>, vector<32x384xbf16>, vector<8x384xf32> -> vector<8x384xf32>
    %c0_4 = arith.constant 0 : index
    %c0_5 = arith.constant 0 : index
    %5 = vector.load %arg5[%c0_4, %c0_5] : memref<1x384xf32, #tpu.memory_space<vmem>>, vector<1x384xf32>
    %6 = vector.broadcast %5 : vector<1x384xf32> to vector<8x384xf32>
    %7 = arith.addf %4, %6 : vector<8x384xf32>
    %8 = vector.shape_cast %7 : vector<8x384xf32> to vector<1x8x384xf32>
    %9 = vector.extract_strided_slice %8 {offsets = [0, 0, 0], sizes = [1, 8, 128], strides = [1, 1, 1]} : vector<1x8x384xf32> to vector<1x8x128xf32>
    %10 = vector.extract_strided_slice %8 {offsets = [0, 0, 128], sizes = [1, 8, 128], strides = [1, 1, 1]} : vector<1x8x384xf32> to vector<1x8x128xf32>
    %11 = vector.extract_strided_slice %8 {offsets = [0, 0, 256], sizes = [1, 8, 128], strides = [1, 1, 1]} : vector<1x8x384xf32> to vector<1x8x128xf32>
    %12 = arith.truncf %9 : vector<1x8x128xf32> to vector<1x8x128xbf16>
    %13 = arith.truncf %10 : vector<1x8x128xf32> to vector<1x8x128xbf16>
    "tpu.trace_start"() <{level = 10 : i32, message = "bqd,bkd->bqk"}> : () -> ()
    %cst_6 = arith.constant dense<0.000000e+00> : vector<1x8x8xf32>
    %14 = tpu.matmul %12, %13, %cst_6 {dimension_numbers = #tpu.dot_dimension_numbers<[2], [2], [1], [1], [0, 0, 0, 1, 1, 1], [0], [0]>} : vector<1x8x128xbf16>, vector<1x8x128xbf16>, vector<1x8x8xf32> -> vector<1x8x8xf32>
    "tpu.trace_stop"() : () -> ()
    %c0_7 = arith.constant 0 : index
    %c0_8 = arith.constant 0 : index
    %c0_9 = arith.constant 0 : index
    %15 = vector.load %arg2[%c0_7, %c0_8, %c0_9] : memref<1x8x1xf32, #tpu.memory_space<vmem>>, vector<1x8x1xf32>
    %cst_10 = arith.constant 0.000000e+00 : f32
    %16 = vector.broadcast %cst_10 : f32 to vector<1x8x1xf32>
    %17 = arith.cmpf ogt, %15, %16 : vector<1x8x1xf32>
    %c0_11 = arith.constant 0 : index
    %c0_12 = arith.constant 0 : index
    %c0_13 = arith.constant 0 : index
    %18 = vector.load %arg3[%c0_11, %c0_12, %c0_13] : memref<1x1x8xf32, #tpu.memory_space<vmem>>, vector<1x1x8xf32>
    %cst_14 = arith.constant 0.000000e+00 : f32
    %19 = vector.broadcast %cst_14 : f32 to vector<1x1x8xf32>
    %20 = arith.cmpf ogt, %18, %19 : vector<1x1x8xf32>
    %21 = vector.broadcast %17 : vector<1x8x1xi1> to vector<1x8x8xi1>
    %22 = vector.broadcast %20 : vector<1x1x8xi1> to vector<1x8x8xi1>
    %23 = arith.andi %21, %22 : vector<1x8x8xi1>
    %24 = tpu.iota {dimensions = array<i32: 1>} : vector<1x8x8xi32>
    %25 = tpu.iota {dimensions = array<i32: 2>} : vector<1x8x8xi32>
    %26 = arith.cmpi sge, %24, %25 : vector<1x8x8xi32>
    %27 = arith.andi %23, %26 : vector<1x8x8xi1>
    %cst_15 = arith.constant -1.000000e+30 : f32
    %28 = vector.broadcast %cst_15 : f32 to vector<1x8x8xf32>
    %29 = arith.select %27, %14, %28 : vector<1x8x8xi1>, vector<1x8x8xf32>
    %cst_16 = arith.constant dense<0xFF800000> : vector<1x8xf32>
    %30 = vector.multi_reduction <maximumf>, %29, %cst_16 [2] : vector<1x8x8xf32> to vector<1x8xf32>
    %31 = vector.shape_cast %30 : vector<1x8xf32> to vector<1x8x1xf32>
    %32 = vector.broadcast %31 : vector<1x8x1xf32> to vector<1x8x8xf32>
    %33 = arith.subf %29, %32 : vector<1x8x8xf32>
    %34 = math.exp %33 : vector<1x8x8xf32>
    %cst_17 = arith.constant dense<0.000000e+00> : vector<1x8xf32>
    %35 = vector.multi_reduction <add>, %34, %cst_17 [2] : vector<1x8x8xf32> to vector<1x8xf32>
    %36 = vector.shape_cast %35 : vector<1x8xf32> to vector<1x8x1xf32>
    %37 = tpu.reciprocal %36 {approx = true} : vector<1x8x1xf32> -> vector<1x8x1xf32>
    %38 = vector.broadcast %37 : vector<1x8x1xf32> to vector<1x8x8xf32>
    %39 = arith.mulf %34, %38 : vector<1x8x8xf32>
    %40 = arith.truncf %39 : vector<1x8x8xf32> to vector<1x8x8xbf16>
    %41 = arith.truncf %11 : vector<1x8x128xf32> to vector<1x8x128xbf16>
    "tpu.trace_start"() <{level = 10 : i32, message = "bqk,bkd->bqd"}> : () -> ()
    %cst_18 = arith.constant dense<0.000000e+00> : vector<1x8x128xf32>
    %42 = tpu.matmul %40, %41, %cst_18 {dimension_numbers = #tpu.dot_dimension_numbers<[2], [1], [1], [2], [0, 0, 0, 1, 1, 2], [0], [0]>} : vector<1x8x8xbf16>, vector<1x8x128xbf16>, vector<1x8x128xf32> -> vector<1x8x128xf32>
    "tpu.trace_stop"() : () -> ()
    %43 = arith.truncf %42 : vector<1x8x128xf32> to vector<1x8x128xbf16>
    %c0_19 = arith.constant 0 : index
    %c0_20 = arith.constant 0 : index
    %c0_21 = arith.constant 0 : index
    %44 = vector.load %arg6[%c0_19, %c0_20, %c0_21] : memref<1x8x384xbf16, #tpu.memory_space<vmem>>, vector<1x8x128xbf16>
    tpu.vector_store %arg6[%c0_19, %c0_20, %c0_21], %43 {strides = array<i32>} : memref<1x8x384xbf16, #tpu.memory_space<vmem>>, vector<1x8x128xbf16>,
    %45 = vector.extract_strided_slice %8 {offsets = [0, 0, 128], sizes = [1, 8, 256], strides = [1, 1, 1]} : vector<1x8x384xf32> to vector<1x8x256xf32>
    %46 = arith.truncf %45 : vector<1x8x256xf32> to vector<1x8x256xbf16>
    %c0_22 = arith.constant 0 : index
    %c0_23 = arith.constant 0 : index
    %c128 = arith.constant 128 : index
    %47 = vector.load %arg6[%c0_22, %c0_23, %c128] : memref<1x8x384xbf16, #tpu.memory_space<vmem>>, vector<1x8x256xbf16>
    tpu.vector_store %arg6[%c0_22, %c0_23, %c128], %46 {strides = array<i32>} : memref<1x8x384xbf16, #tpu.memory_space<vmem>>, vector<1x8x256xbf16>,
    return
  }
  func.func @transform_0(%arg0: i32) -> (i32, i32, i32) {
    %c0_i32 = arith.constant 0 : i32
    %c0_i32_0 = arith.constant 0 : i32
    %c0_i32_1 = arith.constant 0 : i32
    return %arg0, %c0_i32, %c0_i32_0 : i32, i32, i32
  }
  func.func @transform_1(%arg0: i32) -> (i32, i32, i32) {
    %c0_i32 = arith.constant 0 : i32
    %c0_i32_0 = arith.constant 0 : i32
    %c0_i32_1 = arith.constant 0 : i32
    return %arg0, %c0_i32, %c0_i32_0 : i32, i32, i32
  }
  func.func @transform_2(%arg0: i32) -> (i32, i32, i32) {
    %c0_i32 = arith.constant 0 : i32
    %c0_i32_0 = arith.constant 0 : i32
    %c0_i32_1 = arith.constant 0 : i32
    return %arg0, %c0_i32, %c0_i32_0 : i32, i32, i32
  }
  func.func @transform_3(%arg0: i32) -> (i32, i32) {
    %c0_i32 = arith.constant 0 : i32
    %c0_i32_0 = arith.constant 0 : i32
    %c0_i32_1 = arith.constant 0 : i32
    return %c0_i32, %c0_i32_0 : i32, i32
  }
  func.func @transform_4(%arg0: i32) -> (i32, i32) {
    %c0_i32 = arith.constant 0 : i32
    %c0_i32_0 = arith.constant 0 : i32
    %c0_i32_1 = arith.constant 0 : i32
    return %c0_i32, %c0_i32_0 : i32, i32
  }
  func.func @transform_5(%arg0: i32) -> (i32, i32, i32) {
    %c0_i32 = arith.constant 0 : i32
    %c0_i32_0 = arith.constant 0 : i32
    %c0_i32_1 = arith.constant 0 : i32
    return %arg0, %c0_i32, %c0_i32_0 : i32, i32, i32
  }
}

</mosaic_0001>

<llo_original>
// kernel: tpu_custom_call.1
$region0: #{tpu_custom_call.1}
  #allocation0 [shape = 'u32[]', space=smem, size = 0x4, offset = 0x4, fixed_abs, tag = 'smem constant byte address 0x4 - core index']
  #allocation1 [shape = 'u32[144,128]{1,0:T(1,128)}', space=vmem, size = 0x12000, scoped, tag = 'internal scratch']
  %s0 = inlined_call_operand.vmem [shape: f32[2,8,32], index: 0, kind: input, shape index: {}]
  %s1 = inlined_call_operand.vmem [shape: f32[2,8,1], index: 1, kind: input, shape index: {}]
  %s2 = inlined_call_operand.vmem [shape: f32[2,1,8], index: 2, kind: input, shape index: {}]
  %s3 = inlined_call_operand.hbm [shape: bf16[32,384], index: 3, kind: input, shape index: {}]
  %s4 = inlined_call_operand.vmem [shape: f32[1,384], index: 4, kind: input, shape index: {}]
  %s5 = inlined_call_operand.hbm [shape: bf16[2,8,384], index: 5, kind: output, shape index: {}]
  %s6 = sld [smem:[#allocation0]]
  $region57: #{tpu_custom_call.1} parent=0
    _
  %s8 = ssub.s32 1, %s6
  %s9 = scalar_select 0, %s8, %s6
  $region1: #{tpu_custom_call.1} parent=0
    #allocation2 [shape = 'u8[24576]{0}', space=vmem, size = 0x6000, scoped, tag = 'input window, operand 3, single buffered']
    #allocation3 [shape = 's32[2]{0}', space=sflag, size = 0x8, scoped, tag = 'scoped memory for tpu_custom_call.1']
    #allocation4 [shape = 's32[2]{0}', space=sflag, size = 0x8, scoped, tag = 'scoped memory for tpu_custom_call.1']
    #allocation5 [shape = 'u8[12288]{0}', space=vmem, size = 0x3000, scoped, tag = 'output window, operand 0']
    %10 = vsyncpa [#allocation3], 0
    %11 = vsyncpa [#allocation4], 0
    %s12 = scalar_lea.sflag [#allocation4], 1
    %13 = vsyncpa %s12, 0
    loop: start=0, step=1, limit=4
    $region2: #{tpu_custom_call.1} parent=1 // loop_pre_header
      _
    $region3: #{tpu_custom_call.1} parent=1 // loop_header
      %s15 = sphi 0, %s19
      %p16 = scmp.ge.s32.totalorder %s15, 4
      %s25 = sphi 0, %s27
      %s28 = sphi 0, %s25
      %s29 = sphi 0, %s28
      %s45 = sphi 0, %s29
      %s51 = sphi 0, %s53
      %s54 = sphi 0, %s51
      %s55 = sphi 0, %s54
      %s71 = sphi 0, %s55
      %s77 = sphi 0, %s79
      %s80 = sphi 0, %s77
      %s81 = sphi 0, %s80
      %s97 = sphi 0, %s81
      %s101 = sphi 0, %s101
      %s103 = sphi 0, %s101
      %s104 = sphi 0, %s103
      %s118 = sphi 0, %s104
      %s122 = sphi 0, %s122
      %s124 = sphi 0, %s122
      %s125 = sphi 0, %s124
      %s139 = sphi 0, %s125
      %s145 = sphi 0, %s147
      %s148 = sphi 0, %s145
      %s149 = sphi 0, %s148
      %s165 = sphi 0, %s149
    $region4: #{tpu_custom_call.1} parent=1 // loop_header_branch
      %18 = sbr.rel (%p16) target = $region8
    $region5: #{tpu_custom_call.1} parent=1 // loop_body
      %s20 = ssub.s32 %s15, 1
      %s21 = ssub.s32 %s15, 2
      %s22 = sadd.s32 %s15, 1
      %s23 = ssub.s32 %s15, %s22
      %p24 = scmp.eq.s32.totalorder %s23, 0
      %s26 = sadd.s32 %s25, 1
      %s27 = scalar_select %p24, %s25, %s26
      %p30 = pneg %p24
      %p31 = scmp.eq.s32.totalorder %s15, 1
      %p32 = por %p30, %p31
      %p33 = scmp.ne.s32.totalorder %s25, %s28
      %p34 = scmp.eq.s32.totalorder %s15, 0
      %p35 = por %p33, %p34
      %p36 = scmp.ne.s32.totalorder %s25, %s28
      %p37 = scmp.eq.s32.totalorder %s20, 1
      %p38 = por %p36, %p37
      %p39 = scmp.ne.s32.totalorder %s28, %s29
      %p40 = scmp.eq.s32.totalorder %s20, 0
      %p41 = por %p39, %p40
      %p42 = scmp.ne.s32.totalorder %s28, %s29
      %p43 = scmp.eq.s32.totalorder %s21, 1
      %p44 = por %p42, %p43
      %p46 = scmp.ne.s32.totalorder %s29, %s45
      %p47 = scmp.eq.s32.totalorder %s21, 0
      %p48 = por %p46, %p47
      %s49 = ssub.s32 %s15, %s22
      %p50 = scmp.eq.s32.totalorder %s49, 0
      %s52 = sadd.s32 %s51, 1
      %s53 = scalar_select %p50, %s51, %s52
      %p56 = pneg %p50
      %p57 = scmp.eq.s32.totalorder %s15, 1
      %p58 = por %p56, %p57
      %p59 = scmp.ne.s32.totalorder %s51, %s54
      %p60 = scmp.eq.s32.totalorder %s15, 0
      %p61 = por %p59, %p60
      %p62 = scmp.ne.s32.totalorder %s51, %s54
      %p63 = scmp.eq.s32.totalorder %s20, 1
      %p64 = por %p62, %p63
      %p65 = scmp.ne.s32.totalorder %s54, %s55
      %p66 = scmp.eq.s32.totalorder %s20, 0
      %p67 = por %p65, %p66
      %p68 = scmp.ne.s32.totalorder %s54, %s55
      %p69 = scmp.eq.s32.totalorder %s21, 1
      %p70 = por %p68, %p69
      %p72 = scmp.ne.s32.totalorder %s55, %s71
      %p73 = scmp.eq.s32.totalorder %s21, 0
      %p74 = por %p72, %p73
      %s75 = ssub.s32 %s15, %s22
      %p76 = scmp.eq.s32.totalorder %s75, 0
      %s78 = sadd.s32 %s77, 1
      %s79 = scalar_select %p76, %s77, %s78
      %p82 = pneg %p76
      %p83 = scmp.eq.s32.totalorder %s15, 1
      %p84 = por %p82, %p83
      %p85 = scmp.ne.s32.totalorder %s77, %s80
      %p86 = scmp.eq.s32.totalorder %s15, 0
      %p87 = por %p85, %p86
      %p88 = scmp.ne.s32.totalorder %s77, %s80
      %p89 = scmp.eq.s32.totalorder %s20, 1
      %p90 = por %p88, %p89
      %p91 = scmp.ne.s32.totalorder %s80, %s81
      %p92 = scmp.eq.s32.totalorder %s20, 0
      %p93 = por %p91, %p92
      %p94 = scmp.ne.s32.totalorder %s80, %s81
      %p95 = scmp.eq.s32.totalorder %s21, 1
      %p96 = por %p94, %p95
      %p98 = scmp.ne.s32.totalorder %s81, %s97
      %p99 = scmp.eq.s32.totalorder %s21, 0
      %p100 = por %p98, %p99
      %s102 = sadd.s32 %s101, 1
      %p105 = scmp.eq.s32.totalorder %s15, 1
      %p106 = scmp.ne.s32.totalorder %s101, %s103
      %p107 = scmp.eq.s32.totalorder %s15, 0
      %p108 = por %p106, %p107
      %p109 = scmp.ne.s32.totalorder %s101, %s103
      %p110 = scmp.eq.s32.totalorder %s20, 1
      %p111 = por %p109, %p110
      %p112 = scmp.ne.s32.totalorder %s103, %s104
      %p113 = scmp.eq.s32.totalorder %s20, 0
      %p114 = por %p112, %p113
      %p115 = scmp.ne.s32.totalorder %s103, %s104
      %p116 = scmp.eq.s32.totalorder %s21, 1
      %p117 = por %p115, %p116
      %p119 = scmp.ne.s32.totalorder %s104, %s118
      %p120 = scmp.eq.s32.totalorder %s21, 0
      %p121 = por %p119, %p120
      %s123 = sadd.s32 %s122, 1
      %p126 = scmp.eq.s32.totalorder %s15, 1
      %p127 = scmp.ne.s32.totalorder %s122, %s124
      %p128 = scmp.eq.s32.totalorder %s15, 0
      %p129 = por %p127, %p128
      %p130 = scmp.ne.s32.totalorder %s122, %s124
      %p131 = scmp.eq.s32.totalorder %s20, 1
      %p132 = por %p130, %p131
      %p133 = scmp.ne.s32.totalorder %s124, %s125
      %p134 = scmp.eq.s32.totalorder %s20, 0
      %p135 = por %p133, %p134
      %p136 = scmp.ne.s32.totalorder %s124, %s125
      %p137 = scmp.eq.s32.totalorder %s21, 1
      %p138 = por %p136, %p137
      %p140 = scmp.ne.s32.totalorder %s125, %s139
      %p141 = scmp.eq.s32.totalorder %s21, 0
      %p142 = por %p140, %p141
      %s143 = ssub.s32 %s15, %s22
      %p144 = scmp.eq.s32.totalorder %s143, 0
      %s146 = sadd.s32 %s145, 1
      %s147 = scalar_select %p144, %s145, %s146
      %p150 = pneg %p144
      %p151 = scmp.eq.s32.totalorder %s15, 1
      %p152 = por %p150, %p151
      %p153 = scmp.ne.s32.totalorder %s145, %s148
      %p154 = scmp.eq.s32.totalorder %s15, 0
      %p155 = por %p153, %p154
      %p156 = scmp.ne.s32.totalorder %s145, %s148
      %p157 = scmp.eq.s32.totalorder %s20, 1
      %p158 = por %p156, %p157
      %p159 = scmp.ne.s32.totalorder %s148, %s149
      %p160 = scmp.eq.s32.totalorder %s20, 0
      %p161 = por %p159, %p160
      %p162 = scmp.ne.s32.totalorder %s148, %s149
      %p163 = scmp.eq.s32.totalorder %s21, 1
      %p164 = por %p162, %p163
      %p166 = scmp.ne.s32.totalorder %s149, %s165
      %p167 = scmp.eq.s32.totalorder %s21, 0
      %p168 = por %p166, %p167
      %p169 = scmp.le.s32.totalorder 1, %s15
      %p170 = scmp.lt.s32.totalorder %s15, 3
      %p171 = pnand %p169, %p170
      %p172 = pneg %p171
      // Predicated region
      $region9: #{tpu_custom_call.1} parent=5 // pred_check
        _
      $region10: #{tpu_custom_call.1} parent=5 // pred_check_branch
        %174 = sbr.rel (%p171) target = $region12
      $region11: #{tpu_custom_call.1} parent=5 // pred_region
        %s175 = ssub.s32 %s15, 1
        // Predicated region
        $region13: #{tpu_custom_call.1} parent=11 // pred_check
          %p176 = pneg %p114
        $region14: #{tpu_custom_call.1} parent=11 // pred_check_branch
          %178 = sbr.rel (%p176) target = $region16
        $region15: #{tpu_custom_call.1} parent=11 // pred_region
          %s180 = ssub.s32 768, 768
          %181 = vsyncadd [#allocation3], %s180
          %s182 = sshll.u32 [#allocation2], 4
          %s183 = int_to_ptr.vmem [resolvable:$true] %s182
          %188 = dma.hbm_to_vmem [thread:$0]  %s3, 768, %s183, [#allocation3], 192, 192, 12
        $region16: #{tpu_custom_call.1} parent=11 // pred_fallthru
          _
        // Predicated region
        $region17: #{tpu_custom_call.1} parent=11 // pred_check
          %p189 = pneg %p135
        $region18: #{tpu_custom_call.1} parent=11 // pred_check_branch
          %191 = sbr.rel (%p189) target = $region20
        $region19: #{tpu_custom_call.1} parent=11 // pred_region
          _
        $region20: #{tpu_custom_call.1} parent=11 // pred_fallthru
          _
      $region12: #{tpu_custom_call.1} parent=5 // pred_fallthru
        _
      %p192 = scmp.lt.s32.totalorder %s15, 2
      // Predicated region
      $region21: #{tpu_custom_call.1} parent=5 // pred_check
        %p193 = pneg %p192
      $region22: #{tpu_custom_call.1} parent=5 // pred_check_branch
        %195 = sbr.rel (%p193) target = $region24
      $region23: #{tpu_custom_call.1} parent=5 // pred_region
        // Predicated region
        $region25: #{tpu_custom_call.1} parent=23 // pred_check
          %p196 = pneg %p35
        $region26: #{tpu_custom_call.1} parent=23 // pred_check_branch
          %198 = sbr.rel (%p196) target = $region28
        $region27: #{tpu_custom_call.1} parent=23 // pred_region
          %p199 = scmp.lt.s32.totalorder %s15, 1
          %s200 = scalar_select %p199, %s15, 1
          %s201 = smul.addr %s200, 8
          %s202 = scalar_lea.vmem %s0, %s201
        $region28: #{tpu_custom_call.1} parent=23 // pred_fallthru
          _
        // Predicated region
        $region29: #{tpu_custom_call.1} parent=23 // pred_check
          %p203 = pneg %p61
        $region30: #{tpu_custom_call.1} parent=23 // pred_check_branch
          %205 = sbr.rel (%p203) target = $region32
        $region31: #{tpu_custom_call.1} parent=23 // pred_region
          %p206 = scmp.lt.s32.totalorder %s15, 1
          %s207 = scalar_select %p206, %s15, 1
          %s208 = smul.addr %s207, 8
          %s209 = scalar_lea.vmem %s1, %s208
        $region32: #{tpu_custom_call.1} parent=23 // pred_fallthru
          _
        // Predicated region
        $region33: #{tpu_custom_call.1} parent=23 // pred_check
          %p210 = pneg %p87
        $region34: #{tpu_custom_call.1} parent=23 // pred_check_branch
          %212 = sbr.rel (%p210) target = $region36
        $region35: #{tpu_custom_call.1} parent=23 // pred_region
          %p213 = scmp.lt.s32.totalorder %s15, 1
          %s214 = scalar_select %p213, %s15, 1
          %s215 = scalar_lea.vmem %s2, %s214
        $region36: #{tpu_custom_call.1} parent=23 // pred_fallthru
          _
      $region24: #{tpu_custom_call.1} parent=5 // pred_fallthru
        _
      %p216 = scmp.le.s32.totalorder 1, %s15
      %p217 = scmp.lt.s32.totalorder %s15, 3
      %p218 = pnand %p216, %p217
      %p219 = pneg %p218
      // Predicated region
      $region37: #{tpu_custom_call.1} parent=5 // pred_check
        _
      $region38: #{tpu_custom_call.1} parent=5 // pred_check_branch
        %221 = sbr.rel (%p218) target = $region40
      $region39: #{tpu_custom_call.1} parent=5 // pred_region
        %s222 = ssub.s32 %s15, 1
        // Predicated region
        $region41: #{tpu_custom_call.1} parent=39 // pred_check
          %p223 = pneg %p114
        $region42: #{tpu_custom_call.1} parent=39 // pred_check_branch
          %225 = sbr.rel (%p223) target = $region44
        $region43: #{tpu_custom_call.1} parent=39 // pred_region
          %226 = dma.done [#allocation3], 768
        $region44: #{tpu_custom_call.1} parent=39 // pred_fallthru
          _
        %p227 = scmp.lt.s32.totalorder %s20, 1
        %s228 = scalar_select %p227, %s20, 1
        %s229 = smul.addr %s228, 8
        %s230 = scalar_lea.vmem %s0, %s229
        %p231 = pneg %p41
        %p232 = pneg %p38
        %p233 = scmp.lt.s32.totalorder %s20, 1
        %s234 = scalar_select %p233, %s20, 1
        %s235 = smul.addr %s234, 8
        %s236 = scalar_lea.vmem %s1, %s235
        %p237 = pneg %p67
        %p238 = pneg %p64
        %p239 = scmp.lt.s32.totalorder %s20, 1
        %s240 = scalar_select %p239, %s20, 1
        %s241 = scalar_lea.vmem %s2, %s240
        %p242 = pneg %p93
        %p243 = pneg %p90
        %p244 = pneg %p114
        %p245 = pneg %p111
        %p246 = pneg %p135
        %p247 = pneg %p132
        %p248 = pneg %p161
        %p249 = pneg %p158
        %s250 = sand.u32 %s148, 1
        %s251 = scalar_lea.sflag [#allocation4], %s250
        %s252 = sand.u32 %s148, 1
        %s253 = smul.addr %s252, 12
        %s254 = scalar_lea.vmem [#allocation5], %s253
        %p255 = scmp.lt.s32.totalorder %s20, 1
        %s256 = scalar_select %p255, %s20, 1
        %s257 = smul.addr %s256, 8
        %s258 = scalar_lea.vmem %s0, %s257
        %p259 = scmp.lt.s32.totalorder %s20, 1
        %s260 = scalar_select %p259, %s20, 1
        %s261 = smul.addr %s260, 8
        %s262 = scalar_lea.vmem %s1, %s261
        %p263 = scmp.lt.s32.totalorder %s20, 1
        %s264 = scalar_select %p263, %s20, 1
        %s265 = scalar_lea.vmem %s2, %s264
        %v267 = vld [vmem:[%s258] sm:$0xff]
        %v268 = vpack.c.bf16 %v267, %v267
        %v269 = vld [vmem:[#allocation2] sm:$0xff]
        %v270 = vld [vmem:[#allocation2 + $0x8] sm:$0xf]
        %v271 = vld [vmem:[#allocation2 + $0xc] sm:$0xff]
        %v272 = vld [vmem:[#allocation2 + $0x14] sm:$0xf]
        %v273 = vld [vmem:[#allocation2 + $0x18] sm:$0xff]
        %v274 = vld [vmem:[#allocation2 + $0x20] sm:$0xf]
        %v275 = vld [vmem:[#allocation2 + $0x24] sm:$0xff]
        %v276 = vld [vmem:[#allocation2 + $0x2c] sm:$0xf]
        %v277 = vld [vmem:[%s4] sm:$0x7]
        %v279 = vlaneseq
        %v280 = vshrl.u32 %v279, 7
        %v281 = vsub.s32 0, %v280
        %v282 = vrot.slane %v277, %v281
        %v283 = vlaneseq
        %v284 = vshrl.u32 %v283, 7
        %v285 = vsub.s32 1, %v284
        %v286 = vrot.slane %v277, %v285
        %v287 = vlaneseq
        %v288 = vshrl.u32 %v287, 7
        %v289 = vsub.s32 2, %v288
        %v290 = vrot.slane %v277, %v289
        %v302 = vunpack.c.l.b16 %v269
        %v303 = vunpack.c.h.b16 %v269
        %v304 = vunpack.c.l.b16 %v270
        %v305 = vunpack.c.l.b16 %v271
        %v306 = vunpack.c.h.b16 %v271
        %v307 = vunpack.c.l.b16 %v272
        %v308 = vunpack.c.l.b16 %v273
        %v309 = vunpack.c.h.b16 %v273
        %v310 = vunpack.c.l.b16 %v274
        %v311 = vunpack.c.l.b16 %v275
        %v312 = vunpack.c.h.b16 %v275
        %v313 = vunpack.c.l.b16 %v276
        %v314 = vpack.c.b16 %v305, %v302
        %v315 = vpack.c.b16 %v306, %v303
        %v316 = vpack.c.b16 %v307, %v304
        %v317 = vpack.c.b16 %v311, %v308
        %v318 = vpack.c.b16 %v312, %v309
        %v319 = vpack.c.b16 %v313, %v310
        %vm326 = vcmask 261120
        %v328 = vsel %vm326, %v268, 0
        %330 = vmatprep.subr.bf16.mxu0 0
        %331 = vmatpush1.bf16.msra.mxu0 0
        %332 = vmatprep.subr.bf16.mxu0 0
        %333 = vmatpush1.bf16.msra.mxu0 0
        %334 = vmatprep.subr.bf16.mxu0 0
        %335 = vmatpush1.bf16.msra.mxu0 0
        %336 = vmatprep.subr.bf16.mxu0 0
        %337 = vmatpush1.bf16.msra.mxu0 0
        %338 = vmatprep.subr.bf16.mxu0 0
        %339 = vmatpush1.bf16.msra.mxu0 0
        %340 = vmatprep.subr.bf16.mxu0 0
        %341 = vmatpush1.bf16.msra.mxu0 0
        %342 = vmatprep.subr.bf16.mxu0 %v318
        %343 = vmatpush1.bf16.msra.mxu0 %v317
        %344 = vmatprep.subr.bf16.mxu0 %v315
        %345 = vmatpush1.bf16.msra.mxu0 %v314
        %346 = vmatprep.subr.bf16.mxu0 0
        %347 = vmatpush2.bf16.msra.mxu0 0
        %348 = vmatprep.subr.bf16.mxu0 0
        %349 = vmatpush2.bf16.msra.mxu0 0
        %350 = vmatprep.subr.bf16.mxu0 0
        %351 = vmatpush2.bf16.msra.mxu0 0
        %352 = vmatprep.subr.bf16.mxu0 0
        %353 = vmatpush2.bf16.msra.mxu0 0
        %354 = vmatprep.subr.bf16.mxu0 0
        %355 = vmatpush2.bf16.msra.mxu0 0
        %356 = vmatprep.subr.bf16.mxu0 0
        %357 = vmatpush2.bf16.msra.mxu0 0
        %358 = vmatprep.subr.bf16.mxu0 0
        %359 = vmatpush2.bf16.msra.mxu0 0
        %360 = vmatprep.subr.bf16.mxu0 0
        %361 = vmatpush2.bf16.msra.mxu0 0
        %362 = vmatprep.mubr.bf16.mxu0 0
        %363 = vmatmul.mubr.bf16.gmra.mxu0 %v328
        %v364 = vpop.f32.mrf.mxu0
        %v365 = vadd.f32 %v282, %v364
        %v366 = vpop.f32.mrf.mxu0
        %v367 = vadd.f32 %v286, %v366
        %v368 = vpop.f32.mrf.mxu0
        %v369 = vpop.f32.mrf.mxu0
        %370 = vdwg.mxu0
        %371 = vmatprep.subr.bf16.mxu0 0
        %372 = vmatpush1.bf16.msra.mxu0 0
        %373 = vmatprep.subr.bf16.mxu0 0
        %374 = vmatpush1.bf16.msra.mxu0 0
        %375 = vmatprep.subr.bf16.mxu0 0
        %376 = vmatpush1.bf16.msra.mxu0 0
        %377 = vmatprep.subr.bf16.mxu0 0
        %378 = vmatpush1.bf16.msra.mxu0 0
        %379 = vmatprep.subr.bf16.mxu0 0
        %380 = vmatpush1.bf16.msra.mxu0 0
        %381 = vmatprep.subr.bf16.mxu0 0
        %382 = vmatpush1.bf16.msra.mxu0 0
        %383 = vmatprep.subr.bf16.mxu0 0
        %384 = vmatpush1.bf16.msra.mxu0 %v319
        %385 = vmatprep.subr.bf16.mxu0 0
        %386 = vmatpush1.bf16.msra.mxu0 %v316
        %387 = vmatprep.subr.bf16.mxu0 0
        %388 = vmatpush2.bf16.msra.mxu0 0
        %389 = vmatprep.subr.bf16.mxu0 0
        %390 = vmatpush2.bf16.msra.mxu0 0
        %391 = vmatprep.subr.bf16.mxu0 0
        %392 = vmatpush2.bf16.msra.mxu0 0
        %393 = vmatprep.subr.bf16.mxu0 0
        %394 = vmatpush2.bf16.msra.mxu0 0
        %395 = vmatprep.subr.bf16.mxu0 0
        %396 = vmatpush2.bf16.msra.mxu0 0
        %397 = vmatprep.subr.bf16.mxu0 0
        %398 = vmatpush2.bf16.msra.mxu0 0
        %399 = vmatprep.subr.bf16.mxu0 0
        %400 = vmatpush2.bf16.msra.mxu0 0
        %401 = vmatprep.subr.bf16.mxu0 0
        %402 = vmatpush2.bf16.msra.mxu0 0
        %403 = vmatprep.mubr.bf16.mxu0 0
        %404 = vmatmul.mubr.bf16.gmra.mxu0 %v328
        %v405 = vpop.f32.mrf.mxu0
        %v406 = vadd.f32 %v290, %v405
        %v407 = vpop.f32.mrf.mxu0
        %v408 = vpop.f32.mrf.mxu0
        %v409 = vpop.f32.mrf.mxu0
        %410 = vdwg.mxu0
        %v411 = vpack.c.bf16 %v365, %v365
        %v412 = vpack.c.bf16 %v367, %v367
        %413 = vmatprep.subr.bf16.mxu0 0
        %414 = vmatpush1.bf16.xpose.msra.mxu0 0
        %415 = vmatprep.subr.bf16.mxu0 0
        %416 = vmatpush1.bf16.xpose.msra.mxu0 0
        %417 = vmatprep.subr.bf16.mxu0 0
        %418 = vmatpush1.bf16.xpose.msra.mxu0 0
        %419 = vmatprep.subr.bf16.mxu0 0
        %420 = vmatpush1.bf16.xpose.msra.mxu0 0
        %421 = vmatprep.subr.bf16.mxu0 0
        %422 = vmatpush1.bf16.xpose.msra.mxu0 0
        %423 = vmatprep.subr.bf16.mxu0 0
        %424 = vmatpush1.bf16.xpose.msra.mxu0 0
        %425 = vmatprep.subr.bf16.mxu0 0
        %426 = vmatpush1.bf16.xpose.msra.mxu0 0
        %427 = vmatprep.subr.bf16.mxu0 0
        %428 = vmatpush1.bf16.xpose.msra.mxu0 %v412
        %429 = vmatprep.subr.bf16.mxu0 0
        %430 = vmatpush2.bf16.xpose.msra.mxu0 0
        %431 = vmatprep.subr.bf16.mxu0 0
        %432 = vmatpush2.bf16.xpose.msra.mxu0 0
        %433 = vmatprep.subr.bf16.mxu0 0
        %434 = vmatpush2.bf16.xpose.msra.mxu0 0
        %435 = vmatprep.subr.bf16.mxu0 0
        %436 = vmatpush2.bf16.xpose.msra.mxu0 0
        %437 = vmatprep.subr.bf16.mxu0 0
        %438 = vmatpush2.bf16.xpose.msra.mxu0 0
        %439 = vmatprep.subr.bf16.mxu0 0
        %440 = vmatpush2.bf16.xpose.msra.mxu0 0
        %441 = vmatprep.subr.bf16.mxu0 0
        %442 = vmatpush2.bf16.xpose.msra.mxu0 0
        %443 = vmatprep.subr.bf16.mxu0 0
        %444 = vmatpush2.bf16.xpose.msra.mxu0 0
        %445 = vmatprep.mubr.bf16.mxu0 0
        %446 = vmatmul.mubr.bf16.gmra.mxu0 %v411
        %v447 = vpop.f32.mrf.mxu0
        %v448 = vadd.f32 0.0, %v447
        %v449 = vpop.f32.mrf.mxu0
        %v450 = vpop.f32.mrf.mxu0
        %v451 = vpop.f32.mrf.mxu0
        %452 = vdwg.mxu0
        %v453 = vld [vmem:[%s262] sm:$0xff]
        %vm454 = vcmp.gt.f32.partialorder %v453, 0.0
        %v455 = vld [vmem:[%s265] sm:$0x1]
        %vm456 = vcmp.gt.f32.partialorder %v455, 0.0
        %v457 = vsel %vm454, 1, 0
        %458 = vset.pattern.permute.xlu0 0
        %459 = vperm.xlu0 %458, %v457
        %v460 = vpop.permute.xlu0 %459
        %vm461 = vcmp.eq.s32.totalorder %v460, 1
        %v462 = vsel %vm456, 1, 0
        %v463 = vlaneseq
        %v464 = vshrl.u32 %v463, 7
        %v465 = vsub.s32 0, %v464
        %v466 = vrot.slane %v462, %v465
        %vm467 = vcmp.eq.s32.totalorder %v466, 1
        %vm468 = vmand %vm461, %vm467
        %v469 = vlaneseq
        %v470 = vshrl.u32 %v469, 7
        %v471 = vlaneseq
        %v472 = vand.u32 %v471, 127
        %vm473 = vcmp.ge.s32.totalorder %v470, %v472
        %vm474 = vmand %vm468, %vm473
        %v475 = vsel %vm474, %v448, -1e+30
        %vm476 = vcmask 64512
        %v477 = vsel %vm476, %v475, -inf
        %478 = vmax.xlane.f32.xlu0 %v477
        %v479 = vpop.xlane.xlu0 %478
        %v480 = vsub.f32 %v475, %v479
        %v481 = vmul.f32 %v480, 1.442695
        %v482 = vpow.pop %v481
        %v483 = vsel %vm476, %v482, 0.0
        %484 = vadd.xlane.f32.xlu0 %v483
        %v485 = vpop.xlane.xlu0 %484
        %v486 = vrcp.pop %v485
        %v487 = vmul.f32 %v482, %v486
        %v488 = vpack.c.bf16 %v487, %v487
        %v489 = vpack.c.bf16 %v406, %v406
        %v491 = vsel %vm476, %v488, 0
        %vm493 = vcmask 1043456
        %v495 = vsel %vm493, %v489, 0
        %497 = vmatprep.subr.bf16.mxu0 0
        %498 = vmatpush1.bf16.msra.mxu0 0
        %499 = vmatprep.subr.bf16.mxu0 0
        %500 = vmatpush1.bf16.msra.mxu0 0
        %501 = vmatprep.subr.bf16.mxu0 0
        %502 = vmatpush1.bf16.msra.mxu0 0
        %503 = vmatprep.subr.bf16.mxu0 0
        %504 = vmatpush1.bf16.msra.mxu0 0
        %505 = vmatprep.subr.bf16.mxu0 0
        %506 = vmatpush1.bf16.msra.mxu0 0
        %507 = vmatprep.subr.bf16.mxu0 0
        %508 = vmatpush1.bf16.msra.mxu0 0
        %509 = vmatprep.subr.bf16.mxu0 0
        %510 = vmatpush1.bf16.msra.mxu0 0
        %511 = vmatprep.subr.bf16.mxu0 0
        %512 = vmatpush1.bf16.msra.mxu0 %v495
        %513 = vmatprep.subr.bf16.mxu0 0
        %514 = vmatpush2.bf16.msra.mxu0 0
        %515 = vmatprep.subr.bf16.mxu0 0
        %516 = vmatpush2.bf16.msra.mxu0 0
        %517 = vmatprep.subr.bf16.mxu0 0
        %518 = vmatpush2.bf16.msra.mxu0 0
        %519 = vmatprep.subr.bf16.mxu0 0
        %520 = vmatpush2.bf16.msra.mxu0 0
        %521 = vmatprep.subr.bf16.mxu0 0
        %522 = vmatpush2.bf16.msra.mxu0 0
        %523 = vmatprep.subr.bf16.mxu0 0
        %524 = vmatpush2.bf16.msra.mxu0 0
        %525 = vmatprep.subr.bf16.mxu0 0
        %526 = vmatpush2.bf16.msra.mxu0 0
        %527 = vmatprep.subr.bf16.mxu0 0
        %528 = vmatpush2.bf16.msra.mxu0 0
        %529 = vmatprep.mubr.bf16.mxu0 0
        %530 = vmatmul.mubr.bf16.gmra.mxu0 %v491
        %v531 = vpop.f32.mrf.mxu0
        %v532 = vadd.f32 0.0, %v531
        %v533 = vpop.f32.mrf.mxu0
        %v534 = vpop.f32.mrf.mxu0
        %v535 = vpop.f32.mrf.mxu0
        %536 = vdwg.mxu0
        %v537 = vpack.c.bf16 %v532, %v532
        %538 = vst [vmem:[%s254] sm:$0xf] %v537
        %v541 = vunpack.c.l.b16 %v412
        %v542 = vunpack.c.l.b16 %v489
        %v543 = vpack.c.b16 %v542, %v541
        %545 = vst [vmem:[%s254 + $0x4] sm:$0xff] %v543
        %s546 = sand.u32 %s148, 1
        %s547 = scalar_lea.sflag [#allocation4], %s546
        %s548 = sand.u32 %s148, 1
        %s549 = smul.addr %s548, 12
        %s550 = scalar_lea.vmem [#allocation5], %s549
        // Predicated region
        $region45: #{tpu_custom_call.1} parent=39 // pred_check
          %p551 = pneg %p158
        $region46: #{tpu_custom_call.1} parent=39 // pred_check_branch
          %553 = sbr.rel (%p551) target = $region48
        $region47: #{tpu_custom_call.1} parent=39 // pred_region
          %s555 = ssub.s32 192, 192
          %556 = vsyncadd %s547, %s555
          %s557 = smul.addr %s20, 3
          %s558 = smul.addr %s557, 64
          %s559 = scalar_lea.hbm %s5, %s558
          %s561 = sshll.u32 %s550, 4
          %s562 = int_to_ptr.vmem [resolvable:$true] %s561
          %564 = dma.vmem_to_hbm [thread:$0]  %s562, 192, %s559, %s547
        $region48: #{tpu_custom_call.1} parent=39 // pred_fallthru
          _
      $region40: #{tpu_custom_call.1} parent=5 // pred_fallthru
        _
      %p565 = scmp.le.s32.totalorder 2, %s15
      // Predicated region
      $region49: #{tpu_custom_call.1} parent=5 // pred_check
        %p566 = pneg %p565
      $region50: #{tpu_custom_call.1} parent=5 // pred_check_branch
        %568 = sbr.rel (%p566) target = $region52
      $region51: #{tpu_custom_call.1} parent=5 // pred_region
        %s569 = ssub.s32 %s15, 2
        // Predicated region
        $region53: #{tpu_custom_call.1} parent=51 // pred_check
          %p570 = pneg %p164
        $region54: #{tpu_custom_call.1} parent=51 // pred_check_branch
          %572 = sbr.rel (%p570) target = $region56
        $region55: #{tpu_custom_call.1} parent=51 // pred_region
          %s573 = sand.u32 %s149, 1
          %s574 = scalar_lea.sflag [#allocation4], %s573
          %s575 = sand.u32 %s149, 1
          %s576 = smul.addr %s575, 12
          %s577 = scalar_lea.vmem [#allocation5], %s576
          %578 = dma.done %s574, 192
        $region56: #{tpu_custom_call.1} parent=51 // pred_fallthru
          _
      $region52: #{tpu_custom_call.1} parent=5 // pred_fallthru
        _
    $region6: #{tpu_custom_call.1} parent=1 // loop_footer
      %s19 = sadd.s32 1, %s15
    $region7: #{tpu_custom_call.1} parent=1 // loop_footer_branch
      %14 = sbr.rel target = $region3
    $region8: #{tpu_custom_call.1} parent=1 // loop_exit
      _
    %579 = vsyncpa [#allocation3], 1
    %s580 = scalar_lea.sflag [#allocation3], 1
    %581 = vsyncpa %s580, 1
    %582 = vsyncpa [#allocation4], 1
    %s583 = scalar_lea.sflag [#allocation4], 1
    %584 = vsyncpa %s583, 1

</llo_original>
